<compile_context>
chip_gen: v5e
topology: v5e:2x2
jax: 0.10.0
libtpu: 0.0.40
codegen_flags: <defaults>
</compile_context>

<pallas_src>
import functools
import math

import jax
import jax.numpy as jnp
from jax.experimental import pallas as pl
from jax.experimental.pallas import tpu as pltpu

# ---- small demo shapes implied by the module's forward ----
SEQ, BATCH, D_MODEL = 8, 2, 32      # x: [seq_len, batch_size, embedding_dim]
MAX_LEN = 5000                      # module default max_len for the pe buffer
DROPOUT_P = 0.0                     # module default -> dropout is identity


def build_pe_buffer(max_len: int, d_model: int) -> jnp.ndarray:
    """Exactly the buffer registered in PositionalEncoding.__init__: pe[max_len, 1, d_model]."""
    position = jnp.arange(max_len, dtype=jnp.float32)[:, None]
    div_term = jnp.exp(jnp.arange(0, d_model, 2, dtype=jnp.float32)
                       * (-math.log(10000.0) / d_model))
    pe = jnp.zeros((max_len, d_model), jnp.float32)
    pe = pe.at[:, 0::2].set(jnp.sin(position * div_term))
    pe = pe.at[:, 1::2].set(jnp.cos(position * div_term))
    return pe[:, None, :]           # [max_len, 1, d_model]


# ------------------------------------------------------------------ tile sizing helpers

def _round_up(a: int, b: int) -> int:
    return ((a + b - 1) // b) * b


def _vmem_budget_bytes() -> int:
    """~Half the per-core VMEM capacity (v5e/v6e: 128 MiB -> 64 MiB; v7x: 64 MiB -> 32 MiB)."""
    try:
        cap = int(pltpu.get_tpu_info().vmem_capacity_bytes)
    except Exception:               # query unavailable (e.g. interpret mode) -> safe default
        cap = 64 << 20
    return max(16 << 20, min(cap // 2, 64 << 20))


def _choose_seq_tile(seq_len: int, row_bytes: int, budget_bytes: int) -> int:
    """Byte-budgeted seq tile: ~4 MiB x-tiles, VMEM-capped, >=2 grid steps when possible."""
    TARGET_TILE_BYTES = 4 << 20
    # double-buffered x-in + double-buffered out (~4 x-tiles) + pe blocks + slack
    cap_rows = max(8, (budget_bytes // 6) // row_bytes)
    tile = max(8, min(TARGET_TILE_BYTES // row_bytes, cap_rows))
    # guarantee >= 2 grid steps when seq_len allows it (v7x dual-TensorCore sharding)
    if seq_len > 8:
        tile = min(tile, _round_up(pl.cdiv(seq_len, 2), 8))
    if tile >= seq_len:
        return seq_len              # single full-extent block (always layout-legal)
    return max(8, (tile // 8) * 8)  # sublane-aligned (multiple of 8)


# ------------------------------------------------------------------ kernel

def pos_encoding_kernel(x_ref, pe_ref, o_ref, *, batch: int):
    """x tile: (St, batch*d_model); pe tile: (St, d_model).

    Broadcast pe across the batch dim by repeating its row along the lane axis
    (flattened index is b*d_model + d, so a plain lane-tile reproduces pe[d]).
    """
    pe = jnp.tile(pe_ref[...], (1, batch))          # (St, D) -> (St, B*D), VPU/XLU only
    o_ref[...] = x_ref[...] + pe
    # TODO(synk): train-mode dropout (p > 0) would need pltpu.prng_seed/prng_random_bits;
    #             with the module default p=0 (and in eval mode) dropout is the identity.


# ------------------------------------------------------------------ wrapper

def positional_encoding(x: jax.Array, pe: jax.Array, *, seq_tile: int | None = None) -> jax.Array:
    """Forward of PositionalEncoding: x + pe[:seq_len]  (dropout == identity).

    x  : [seq_len, batch, d_model]
    pe : [max_len, 1, d_model]  -- full registered buffer; only the pe[:seq_len] window
                                   (cast to x.dtype) is ever read from HBM by the kernel.
    """
    seq_len, batch, d_model = x.shape
    lanes = batch * d_model

    x2d = x.reshape(seq_len, lanes)                          # free view: contiguous layout
    pe_win = pe[:seq_len, 0, :].astype(x.dtype)              # (seq_len, d_model), minimal HBM read

    row_bytes = lanes * jnp.dtype(x.dtype).itemsize
    budget = _vmem_budget_bytes()
    if seq_tile is None:
        seq_tile = _choose_seq_tile(seq_len, row_bytes, budget)
    grid = (pl.cdiv(seq_len, seq_tile),)

    out2d = pl.pallas_call(
        functools.partial(pos_encoding_kernel, batch=batch),
        grid=grid,
        in_specs=[
            # x tile i covers rows [i*seq_tile, (i+1)*seq_tile); lane axis is full-extent.
            pl.BlockSpec((seq_tile, lanes), lambda i: (i, 0)),
            # matching (small) window of the sliced pe buffer.
            pl.BlockSpec((seq_tile, d_model), lambda i: (i, 0)),
        ],
        out_specs=pl.BlockSpec((seq_tile, lanes), lambda i: (i, 0)),
        out_shape=jax.ShapeDtypeStruct((seq_len, lanes), x.dtype),
        # semantics are x += pe: reuse x's buffer (free when the caller donates x).
        input_output_aliases={0: 0},
        compiler_params=pltpu.CompilerParams(
            # seq tiles are independent -> shard across TensorCores on v7x; no-op on v5e/v6e.
            dimension_semantics=("parallel",),
            vmem_limit_bytes=budget),
    )(x2d, pe_win)

    return out2d.reshape(seq_len, batch, d_model)


# ------------------------------------------------------------------ demo / self-check

if __name__ == "__main__":
    key = jax.random.PRNGKey(0)
    x = jax.random.normal(key, (SEQ, BATCH, D_MODEL), jnp.float32)   # [seq_len, batch, d_model]
    pe = build_pe_buffer(MAX_LEN, D_MODEL)

    out = jax.jit(positional_encoding)(x, pe)
    out = jax.block_until_ready(out)

    # pure-JAX reference of the module forward (dropout p=0 -> identity)
    ref = x + pe[:SEQ]
    assert out.shape == (SEQ, BATCH, D_MODEL), out.shape
    assert bool(jnp.all(jnp.isfinite(out)))
    assert bool(jnp.allclose(out, ref, atol=1e-6, rtol=1e-6)), "mismatch vs reference"
    print("KERNEL_OK")
</pallas_src>

<mosaic_0001>
module attributes {stable_mosaic.version = 11 : i64} {
  func.func @pos_encoding_kernel(%arg0: i32, %arg1: memref<8x64xf32, #tpu.memory_space<vmem>>, %arg2: memref<8x32xf32, #tpu.memory_space<vmem>>, %arg3: memref<8x64xf32, #tpu.memory_space<vmem>>) attributes {dimension_semantics = [#tpu.dimension_semantics<parallel>], iteration_bounds = array<i64: 1>, scalar_prefetch = 0 : i64, scratch_operands = 0 : i64, tpu.core_type = #tpu.core_type<tc>, window_params = [{transform_indices = @transform_0, window_bounds = array<i64: 8, 64>}, {transform_indices = @transform_1, window_bounds = array<i64: 8, 32>}, {transform_indices = @transform_2, window_bounds = array<i64: 8, 64>}]} {
    %c0 = arith.constant 0 : index
    %c0_0 = arith.constant 0 : index
    %0 = vector.load %arg2[%c0, %c0_0] : memref<8x32xf32, #tpu.memory_space<vmem>>, vector<8x32xf32>
    %1 = tpu.concatenate %0, %0 in 1 : vector<8x32xf32>, vector<8x32xf32> -> vector<8x64xf32>
    %c0_1 = arith.constant 0 : index
    %c0_2 = arith.constant 0 : index
    %2 = vector.load %arg1[%c0_1, %c0_2] : memref<8x64xf32, #tpu.memory_space<vmem>>, vector<8x64xf32>
    %3 = arith.addf %2, %1 : vector<8x64xf32>
    %c0_3 = arith.constant 0 : index
    %c0_4 = arith.constant 0 : index
    %4 = vector.load %arg3[%c0_3, %c0_4] : memref<8x64xf32, #tpu.memory_space<vmem>>, vector<8x64xf32>
    tpu.vector_store %arg3[%c0_3, %c0_4], %3 {strides = array<i32>} : memref<8x64xf32, #tpu.memory_space<vmem>>, vector<8x64xf32>,
    return
  }
  func.func @transform_0(%arg0: i32) -> (i32, i32) {
    %c0_i32 = arith.constant 0 : i32
    %c0_i32_0 = arith.constant 0 : i32
    return %arg0, %c0_i32 : i32, i32
  }
  func.func @transform_1(%arg0: i32) -> (i32, i32) {
    %c0_i32 = arith.constant 0 : i32
    %c0_i32_0 = arith.constant 0 : i32
    return %arg0, %c0_i32 : i32, i32
  }
  func.func @transform_2(%arg0: i32) -> (i32, i32) {
    %c0_i32 = arith.constant 0 : i32
    %c0_i32_0 = arith.constant 0 : i32
    return %arg0, %c0_i32 : i32, i32
  }
}

</mosaic_0001>

<llo_original>
// kernel: positional_encoding.1
$region0: #{positional_encoding.1}
  #allocation0 [shape = 'u32[]', space=smem, size = 0x4, offset = 0x4, fixed_abs, tag = 'smem constant byte address 0x4 - core index']
  #allocation1 [shape = 'u32[72,128]{1,0:T(1,128)}', space=vmem, size = 0x9000, scoped, tag = 'internal scratch']
  %s0 = inlined_call_operand.vmem [shape: f32[8,64], index: 0, kind: input, shape index: {}, may-alias: {0,2}]
  %s1 = inlined_call_operand.vmem [shape: f32[8,32], index: 1, kind: input, shape index: {}]
  %s2 = inlined_call_operand.vmem [shape: f32[8,64], index: 2, kind: output, shape index: {}, may-alias: {0,2}]
  %s3 = sld [smem:[#allocation0]]
  $region18: #{positional_encoding.1} parent=0
    _
  %s5 = ssub.s32 1, %s3
  %s6 = scalar_select 0, %s5, %s3
  // Predicated region
  $region2: #{positional_encoding.1} parent=0 // pred_check
    _
  $region3: #{positional_encoding.1} parent=0 // pred_check_branch
    %8 = sbr.rel (0) target = $region5
  $region4: #{positional_encoding.1} parent=0 // pred_region
    _
  $region5: #{positional_encoding.1} parent=0 // pred_fallthru
    _
  // Predicated region
  $region6: #{positional_encoding.1} parent=0 // pred_check
    _
  $region7: #{positional_encoding.1} parent=0 // pred_check_branch
    %10 = sbr.rel (0) target = $region9
  $region8: #{positional_encoding.1} parent=0 // pred_region
    _
  $region9: #{positional_encoding.1} parent=0 // pred_fallthru
    _
  %v11 = vld [vmem:[%s1] sm:$0xff]
  %13 = vrot.lane.b32.xlu0 %v11, 32
  %v14 = vpop.permute.xlu0 %13
  %vm16 = vcmask 261120
  %v17 = vsel %vm16, %v11, %v14
  %v18 = vld [vmem:[%s0] sm:$0xff]
  %v19 = vadd.f32 %v18, %v17
  %vm20 = vcmask 523264
  %21 = vst.msk [vmem:[%s2] sm:$0xff] %vm20, %v19
  // Predicated region
  $region10: #{positional_encoding.1} parent=0 // pred_check
    _
  $region11: #{positional_encoding.1} parent=0 // pred_check_branch
    %23 = sbr.rel (0) target = $region13
  $region12: #{positional_encoding.1} parent=0 // pred_region
    _
  $region13: #{positional_encoding.1} parent=0 // pred_fallthru
    _
  // Predicated region
  $region14: #{positional_encoding.1} parent=0 // pred_check
    _
  $region15: #{positional_encoding.1} parent=0 // pred_check_branch
    %25 = sbr.rel (0) target = $region17
  $region16: #{positional_encoding.1} parent=0 // pred_region
    _
  $region17: #{positional_encoding.1} parent=0 // pred_fallthru
    _

</llo_original>
